<compile_context>
chip_gen: v7x
topology: tpu7x:2x2x1
jax: 0.10.0
libtpu: 0.0.40
codegen_flags: <defaults>
</compile_context>

<pallas_src>
import functools
import math

import jax
import jax.numpy as jnp
from jax import lax
from jax.experimental import pallas as pl
from jax.experimental.pallas import tpu as pltpu


# ----------------------------------------------------------------------------
# Kernel: one batch tile per grid step, tiny weights resident in VMEM.
# ----------------------------------------------------------------------------
def mlp_kernel(x_ref, w1_ref, b1_ref, w2_ref, b2_ref, w3_ref, b3_ref, o_ref,
               *, elementwise_bf16):
    # Cast the x tile on the VPU; x arrives from HBM in its native dtype.
    xb = x_ref[...].astype(jnp.bfloat16)                               # (tb, 64)

    # Layer 1, feature-major: (96, 64) . (tb, 64)^T -> (96, tb), f32 accumulate.
    z1 = lax.dot_general(w1_ref[...], xb,
                         dimension_numbers=(((1,), (1,)), ((), ())),
                         preferred_element_type=jnp.float32)           # (96, tb)
    if elementwise_bf16:
        h1 = jnp.tanh(z1.astype(jnp.bfloat16) + b1_ref[...].astype(jnp.bfloat16))
    else:
        h1 = jnp.tanh(z1 + b1_ref[...]).astype(jnp.bfloat16)           # (96, tb)

    # Layer 2: (34, 96) . (96, tb) -> (34, tb).
    z2 = jnp.dot(w2_ref[...], h1, preferred_element_type=jnp.float32)
    if elementwise_bf16:
        h2 = jnp.tanh(z2.astype(jnp.bfloat16) + b2_ref[...].astype(jnp.bfloat16))
    else:
        h2 = jnp.tanh(z2 + b2_ref[...]).astype(jnp.bfloat16)           # (34, tb)

    # Output layer: (1, 34) . (34, tb) -> (1, tb) -- lane-dense, no transpose.
    out = jnp.dot(w3_ref[...], h2, preferred_element_type=jnp.float32)
    o_ref[...] = out + b3_ref[...]                                     # (1, tb)


# ----------------------------------------------------------------------------
# Tiling / dispatch.
# ----------------------------------------------------------------------------
def _round_up(n, m):
    return ((n + m - 1) // m) * m


def _choose_tile(batch, batch_tile):
    tb = 2048 if batch_tile is None else int(batch_tile)
    tb = max(128, _round_up(tb, 128))
    if tb >= batch:
        # Single block covering the whole batch: full-array-dim blocks need no
        # (8, 128) alignment and no over-read at all.
        return batch
    return tb


def _default_elementwise_bf16():
    try:
        kind = jax.devices()[0].device_kind.lower()
    except Exception:
        return False
    # bf16 VPU/EUP paths exist on v6e (Trillium) and v7x; keep f32 elementwise
    # on v5e and older so the EUP path stays portable.
    return any(tag in kind for tag in ("v6", "trillium", "v7", "tpu7"))


def bewertungsnetz_forward(x, params, *, batch_tile=None, elementwise_bf16=None):
    """x: (B, 8, 8) or any (B, ...) with 64 features. Returns (B, 1) float32."""
    w1, b1, w2, b2, w3, b3 = params
    B = x.shape[0]
    z = x.reshape(B, -1)                      # row-major flatten == nn.Flatten
    assert z.shape[1] == 64

    if elementwise_bf16 is None:
        elementwise_bf16 = _default_elementwise_bf16()

    tb = _choose_tile(B, batch_tile)
    grid_n = pl.cdiv(B, tb)
    out_cols = grid_n * tb                    # pad only the (cheap) output

    # Tiny weights: bf16 for the MXU, kept in PyTorch (out, in) layout, resident
    # in VMEM across grid steps via constant index maps.
    w1b = w1.astype(jnp.bfloat16)             # (96, 64)
    w2b = w2.astype(jnp.bfloat16)             # (34, 96)
    w3b = w3.astype(jnp.bfloat16)             # (1, 34)
    b1c = b1.reshape(96, 1).astype(jnp.float32)
    b2c = b2.reshape(34, 1).astype(jnp.float32)
    b3c = b3.reshape(1, 1).astype(jnp.float32)

    def rep(shape):
        return pl.BlockSpec(shape, lambda i: (0, 0))

    kernel = functools.partial(mlp_kernel, elementwise_bf16=elementwise_bf16)

    out = pl.pallas_call(
        kernel,
        out_shape=jax.ShapeDtypeStruct((1, out_cols), jnp.float32),
        grid_spec=pltpu.PrefetchScalarGridSpec(
            num_scalar_prefetch=0,
            grid=(grid_n,),
            in_specs=[
                pl.BlockSpec((tb, 64), lambda i: (i, 0)),   # x, native dtype
                rep((96, 64)), rep((96, 1)),                # layer 1
                rep((34, 96)), rep((34, 1)),                # layer 2
                rep((1, 34)),  rep((1, 1)),                 # output layer
            ],
            out_specs=pl.BlockSpec((1, tb), lambda i: (0, i)),   # lane-dense row
        ),
        compiler_params=pltpu.CompilerParams(
            dimension_semantics=("parallel",)),
    )(z, w1b, b1c, w2b, b2c, w3b, b3c)

    return out[0, :B].reshape(B, 1)


# ----------------------------------------------------------------------------
# Deterministic init matching nn.init.xavier_uniform_ / zeros_ (PyTorch layout:
# Linear.weight is (out, in), which is exactly the feature-major layout the
# kernel consumes).
# ----------------------------------------------------------------------------
def xavier_uniform(key, fan_in, fan_out, shape):
    limit = math.sqrt(6.0 / (fan_in + fan_out))
    return jax.random.uniform(key, shape, jnp.float32, -limit, limit)


def init_params(key):
    k1, k2, k3 = jax.random.split(key, 3)
    w1 = xavier_uniform(k1, 64, 96, (96, 64))
    b1 = jnp.zeros((96,), jnp.float32)
    w2 = xavier_uniform(k2, 96, 34, (34, 96))
    b2 = jnp.zeros((34,), jnp.float32)
    w3 = xavier_uniform(k3, 34, 1, (1, 34))
    b3 = jnp.zeros((1,), jnp.float32)
    return (w1, b1, w2, b2, w3, b3)


# Pure-JAX references.
def reference_forward_f32(x, params):
    w1, b1, w2, b2, w3, b3 = params
    z = x.reshape(x.shape[0], -1).astype(jnp.float32)
    z = jnp.tanh(z @ w1.T + b1)
    z = jnp.tanh(z @ w2.T + b2)
    return z @ w3.T + b3


def reference_forward_recipe(x, params, elementwise_bf16):
    """Mirrors the kernel's bf16-MXU / f32-accumulate recipe exactly."""
    w1, b1, w2, b2, w3, b3 = params
    z = x.reshape(x.shape[0], -1).astype(jnp.bfloat16)
    w1b, w2b, w3b = (w.astype(jnp.bfloat16) for w in (w1, w2, w3))
    z1 = jnp.dot(z, w1b.T, preferred_element_type=jnp.float32)
    if elementwise_bf16:
        h1 = jnp.tanh(z1.astype(jnp.bfloat16) + b1.astype(jnp.bfloat16))
    else:
        h1 = jnp.tanh(z1 + b1).astype(jnp.bfloat16)
    z2 = jnp.dot(h1, w2b.T, preferred_element_type=jnp.float32)
    if elementwise_bf16:
        h2 = jnp.tanh(z2.astype(jnp.bfloat16) + b2.astype(jnp.bfloat16))
    else:
        h2 = jnp.tanh(z2 + b2).astype(jnp.bfloat16)
    return jnp.dot(h2, w3b.T, preferred_element_type=jnp.float32) + b3


if __name__ == "__main__":
    key = jax.random.PRNGKey(0)
    k_params, k_x1, k_x2, kb1, kb2, kb3 = jax.random.split(key, 6)
    params = init_params(k_params)
    ew_bf16 = _default_elementwise_bf16()

    # Check 1: small batch of 8x8 "positions" (64 features), single full block.
    x_small = jax.random.normal(k_x1, (8, 8, 8), dtype=jnp.float32)
    out_small = jax.block_until_ready(
        bewertungsnetz_forward(x_small, params, elementwise_bf16=ew_bf16))
    assert out_small.shape == (8, 1)
    ref_recipe = reference_forward_recipe(x_small, params, ew_bf16)
    ref_f32 = reference_forward_f32(x_small, params)
    assert jnp.allclose(out_small, ref_recipe, atol=2e-2, rtol=5e-2)
    assert jnp.allclose(out_small, ref_f32, atol=1e-1, rtol=1e-1)

    # Check 2: multi-step grid with a ragged last block (no input padding) and
    # non-zero biases, so the bias-add path is actually exercised.
    b1r = 0.1 * jax.random.normal(kb1, (96,), jnp.float32)
    b2r = 0.1 * jax.random.normal(kb2, (34,), jnp.float32)
    b3r = 0.1 * jax.random.normal(kb3, (1,), jnp.float32)
    params_r = (params[0], b1r, params[2], b2r, params[4], b3r)
    x_big = jax.random.normal(k_x2, (200, 8, 8), dtype=jnp.float32)
    out_big = jax.block_until_ready(
        bewertungsnetz_forward(x_big, params_r, batch_tile=128,
                               elementwise_bf16=ew_bf16))
    assert out_big.shape == (200, 1)
    assert jnp.allclose(out_big,
                        reference_forward_recipe(x_big, params_r, ew_bf16),
                        atol=2e-2, rtol=5e-2)

    print("KERNEL_OK")
</pallas_src>

<mosaic_0001>
module attributes {stable_mosaic.version = 11 : i64} {
  func.func @mlp_kernel(%arg0: i32, %arg1: memref<8x64xf32, #tpu.memory_space<vmem>>, %arg2: memref<96x64xbf16, #tpu.memory_space<vmem>>, %arg3: memref<96x1xf32, #tpu.memory_space<vmem>>, %arg4: memref<34x96xbf16, #tpu.memory_space<vmem>>, %arg5: memref<34x1xf32, #tpu.memory_space<vmem>>, %arg6: memref<1x34xbf16, #tpu.memory_space<vmem>>, %arg7: memref<1x1xf32, #tpu.memory_space<vmem>>, %arg8: memref<1x8xf32, #tpu.memory_space<vmem>>) attributes {dimension_semantics = [#tpu.dimension_semantics<parallel>], iteration_bounds = array<i64: 1>, scalar_prefetch = 0 : i64, scratch_operands = 0 : i64, tpu.core_type = #tpu.core_type<tc>, window_params = [{transform_indices = @transform_0, window_bounds = array<i64: 8, 64>}, {pipeline_mode = #tpu.pipeline_mode<synchronous>, transform_indices = @transform_1, window_bounds = array<i64: 96, 64>}, {pipeline_mode = #tpu.pipeline_mode<synchronous>, transform_indices = @transform_2, window_bounds = array<i64: 96, 1>}, {pipeline_mode = #tpu.pipeline_mode<synchronous>, transform_indices = @transform_3, window_bounds = array<i64: 34, 96>}, {pipeline_mode = #tpu.pipeline_mode<synchronous>, transform_indices = @transform_4, window_bounds = array<i64: 34, 1>}, {pipeline_mode = #tpu.pipeline_mode<synchronous>, transform_indices = @transform_5, window_bounds = array<i64: 1, 34>}, {pipeline_mode = #tpu.pipeline_mode<synchronous>, transform_indices = @transform_6, window_bounds = array<i64: 1, 1>}, {transform_indices = @transform_7, window_bounds = array<i64: 1, 8>}]} {
    %c0 = arith.constant 0 : index
    %c0_0 = arith.constant 0 : index
    %0 = vector.load %arg1[%c0, %c0_0] : memref<8x64xf32, #tpu.memory_space<vmem>>, vector<8x64xf32>
    %1 = arith.truncf %0 : vector<8x64xf32> to vector<8x64xbf16>
    %c0_1 = arith.constant 0 : index
    %c0_2 = arith.constant 0 : index
    %2 = vector.load %arg2[%c0_1, %c0_2] : memref<96x64xbf16, #tpu.memory_space<vmem>>, vector<96x64xbf16>
    %cst = arith.constant dense<0.000000e+00> : vector<96x8xf32>
    %3 = tpu.matmul %2, %1, %cst {dimension_numbers = #tpu.dot_dimension_numbers<[1], [1], [0], [0], [0, 0, 1, 0], [], []>} : vector<96x64xbf16>, vector<8x64xbf16>, vector<96x8xf32> -> vector<96x8xf32>
    %c0_3 = arith.constant 0 : index
    %c0_4 = arith.constant 0 : index
    %4 = vector.load %arg3[%c0_3, %c0_4] : memref<96x1xf32, #tpu.memory_space<vmem>>, vector<96x1xf32>
    %5 = vector.broadcast %4 : vector<96x1xf32> to vector<96x8xf32>
    %6 = arith.addf %3, %5 : vector<96x8xf32>
    %7 = math.tanh %6 : vector<96x8xf32>
    %8 = arith.truncf %7 : vector<96x8xf32> to vector<96x8xbf16>
    %c0_5 = arith.constant 0 : index
    %c0_6 = arith.constant 0 : index
    %9 = vector.load %arg4[%c0_5, %c0_6] : memref<34x96xbf16, #tpu.memory_space<vmem>>, vector<34x96xbf16>
    %cst_7 = arith.constant dense<0.000000e+00> : vector<34x8xf32>
    %10 = tpu.matmul %9, %8, %cst_7 {dimension_numbers = #tpu.dot_dimension_numbers<[1], [0], [0], [1], [0, 0, 1, 1], [], []>} : vector<34x96xbf16>, vector<96x8xbf16>, vector<34x8xf32> -> vector<34x8xf32>
    %c0_8 = arith.constant 0 : index
    %c0_9 = arith.constant 0 : index
    %11 = vector.load %arg5[%c0_8, %c0_9] : memref<34x1xf32, #tpu.memory_space<vmem>>, vector<34x1xf32>
    %12 = vector.broadcast %11 : vector<34x1xf32> to vector<34x8xf32>
    %13 = arith.addf %10, %12 : vector<34x8xf32>
    %14 = math.tanh %13 : vector<34x8xf32>
    %15 = arith.truncf %14 : vector<34x8xf32> to vector<34x8xbf16>
    %c0_10 = arith.constant 0 : index
    %c0_11 = arith.constant 0 : index
    %16 = vector.load %arg6[%c0_10, %c0_11] : memref<1x34xbf16, #tpu.memory_space<vmem>>, vector<1x34xbf16>
    %cst_12 = arith.constant dense<0.000000e+00> : vector<1x8xf32>
    %17 = tpu.matmul %16, %15, %cst_12 {dimension_numbers = #tpu.dot_dimension_numbers<[1], [0], [0], [1], [0, 0, 1, 1], [], []>} : vector<1x34xbf16>, vector<34x8xbf16>, vector<1x8xf32> -> vector<1x8xf32>
    %c0_13 = arith.constant 0 : index
    %c0_14 = arith.constant 0 : index
    %18 = vector.load %arg7[%c0_13, %c0_14] : memref<1x1xf32, #tpu.memory_space<vmem>>, vector<1x1xf32>
    %19 = vector.broadcast %18 : vector<1x1xf32> to vector<1x8xf32>
    %20 = arith.addf %17, %19 : vector<1x8xf32>
    %c0_15 = arith.constant 0 : index
    %c0_16 = arith.constant 0 : index
    %21 = vector.load %arg8[%c0_15, %c0_16] : memref<1x8xf32, #tpu.memory_space<vmem>>, vector<1x8xf32>
    tpu.vector_store %arg8[%c0_15, %c0_16], %20 {strides = array<i32>} : memref<1x8xf32, #tpu.memory_space<vmem>>, vector<1x8xf32>,
    return
  }
  func.func @transform_0(%arg0: i32) -> (i32, i32) {
    %c0_i32 = arith.constant 0 : i32
    %c0_i32_0 = arith.constant 0 : i32
    return %arg0, %c0_i32 : i32, i32
  }
  func.func @transform_1(%arg0: i32) -> (i32, i32) {
    %c0_i32 = arith.constant 0 : i32
    %c0_i32_0 = arith.constant 0 : i32
    %c0_i32_1 = arith.constant 0 : i32
    return %c0_i32, %c0_i32_0 : i32, i32
  }
  func.func @transform_2(%arg0: i32) -> (i32, i32) {
    %c0_i32 = arith.constant 0 : i32
    %c0_i32_0 = arith.constant 0 : i32
    %c0_i32_1 = arith.constant 0 : i32
    return %c0_i32, %c0_i32_0 : i32, i32
  }
  func.func @transform_3(%arg0: i32) -> (i32, i32) {
    %c0_i32 = arith.constant 0 : i32
    %c0_i32_0 = arith.constant 0 : i32
    %c0_i32_1 = arith.constant 0 : i32
    return %c0_i32, %c0_i32_0 : i32, i32
  }
  func.func @transform_4(%arg0: i32) -> (i32, i32) {
    %c0_i32 = arith.constant 0 : i32
    %c0_i32_0 = arith.constant 0 : i32
    %c0_i32_1 = arith.constant 0 : i32
    return %c0_i32, %c0_i32_0 : i32, i32
  }
  func.func @transform_5(%arg0: i32) -> (i32, i32) {
    %c0_i32 = arith.constant 0 : i32
    %c0_i32_0 = arith.constant 0 : i32
    %c0_i32_1 = arith.constant 0 : i32
    return %c0_i32, %c0_i32_0 : i32, i32
  }
  func.func @transform_6(%arg0: i32) -> (i32, i32) {
    %c0_i32 = arith.constant 0 : i32
    %c0_i32_0 = arith.constant 0 : i32
    %c0_i32_1 = arith.constant 0 : i32
    return %c0_i32, %c0_i32_0 : i32, i32
  }
  func.func @transform_7(%arg0: i32) -> (i32, i32) {
    %c0_i32 = arith.constant 0 : i32
    %c0_i32_0 = arith.constant 0 : i32
    return %c0_i32, %arg0 : i32, i32
  }
}

</mosaic_0001>

<llo_original>
// kernel: tpu_custom_call.1
$region0: #{tpu_custom_call.1}
  #allocation0 [shape = 'u32[]', space=smem, size = 0x4, offset = 0x4, fixed_abs, tag = 'smem constant byte address 0x4 - core index']
  #allocation1 [shape = 'u32[144,128]{1,0:T(1,128)}', space=vmem, size = 0x12000, scoped, tag = 'internal scratch']
  #allocation2 [shape = 'f32[1,1]{1,0:T(1,128)S(1)}', space=vmem, size = 0x200, scoped, tag = 'scoped memory for tpu_custom_call.1']
  %s0 = inlined_call_operand.vmem [shape: f32[8,64], index: 0, kind: input, shape index: {}]
  %s1 = inlined_call_operand.vmem [shape: bf16[96,64], index: 1, kind: input, shape index: {}]
  %s2 = inlined_call_operand.vmem [shape: f32[96,1], index: 2, kind: input, shape index: {}]
  %s3 = inlined_call_operand.vmem [shape: bf16[34,96], index: 3, kind: input, shape index: {}]
  %s4 = inlined_call_operand.vmem [shape: f32[34,1], index: 4, kind: input, shape index: {}]
  %s5 = inlined_call_operand.vmem [shape: bf16[1,34], index: 5, kind: input, shape index: {}]
  %s6 = inlined_call_operand.<no memory space> [shape: f32[1,1], index: 6, kind: input, shape index: {}]
  %s7 = inlined_call_operand.hbm [shape: f32[1,8], index: 7, kind: output, shape index: {}]
  %s8 = sld [smem:[#allocation0]]
  $region38: #{tpu_custom_call.1} parent=0
    _
  %s10 = ssub.s32 1, %s8
  %s11 = scalar_select 0, %s10, %s8
  %v12 = vstv %s6
  %13 = vst [vmem:[#allocation2] sm:$0x1] %v12
  $region1: #{tpu_custom_call.1} parent=0
    #allocation3 [shape = 'u8[512]{0}', space=vmem, size = 0x400, scoped, tag = 'output window, operand 0, single buffered']
    #allocation4 [shape = 's32[1]{0}', space=sflag, size = 0x4, scoped, tag = 'scoped memory for tpu_custom_call.1']
    %14 = vsyncpa [#allocation4], 0
    // Predicated region
    $region2: #{tpu_custom_call.1} parent=1 // pred_check
      _
    $region3: #{tpu_custom_call.1} parent=1 // pred_check_branch
      %16 = sbr.rel (0) target = $region5
    $region4: #{tpu_custom_call.1} parent=1 // pred_region
      _
    $region5: #{tpu_custom_call.1} parent=1 // pred_fallthru
      _
    // Predicated region
    $region6: #{tpu_custom_call.1} parent=1 // pred_check
      _
    $region7: #{tpu_custom_call.1} parent=1 // pred_check_branch
      %18 = sbr.rel (0) target = $region9
    $region8: #{tpu_custom_call.1} parent=1 // pred_region
      _
    $region9: #{tpu_custom_call.1} parent=1 // pred_fallthru
      _
    // Predicated region
    $region10: #{tpu_custom_call.1} parent=1 // pred_check
      _
    $region11: #{tpu_custom_call.1} parent=1 // pred_check_branch
      %20 = sbr.rel (0) target = $region13
    $region12: #{tpu_custom_call.1} parent=1 // pred_region
      _
    $region13: #{tpu_custom_call.1} parent=1 // pred_fallthru
      _
    // Predicated region
    $region14: #{tpu_custom_call.1} parent=1 // pred_check
      _
    $region15: #{tpu_custom_call.1} parent=1 // pred_check_branch
      %22 = sbr.rel (0) target = $region17
    $region16: #{tpu_custom_call.1} parent=1 // pred_region
      _
    $region17: #{tpu_custom_call.1} parent=1 // pred_fallthru
      _
    // Predicated region
    $region18: #{tpu_custom_call.1} parent=1 // pred_check
      _
    $region19: #{tpu_custom_call.1} parent=1 // pred_check_branch
      %24 = sbr.rel (0) target = $region21
    $region20: #{tpu_custom_call.1} parent=1 // pred_region
      _
    $region21: #{tpu_custom_call.1} parent=1 // pred_fallthru
      _
    // Predicated region
    $region22: #{tpu_custom_call.1} parent=1 // pred_check
      _
    $region23: #{tpu_custom_call.1} parent=1 // pred_check_branch
      %26 = sbr.rel (0) target = $region25
    $region24: #{tpu_custom_call.1} parent=1 // pred_region
      _
    $region25: #{tpu_custom_call.1} parent=1 // pred_fallthru
      _
    // Predicated region
    $region26: #{tpu_custom_call.1} parent=1 // pred_check
      _
    $region27: #{tpu_custom_call.1} parent=1 // pred_check_branch
      %28 = sbr.rel (0) target = $region29
    $region28: #{tpu_custom_call.1} parent=1 // pred_region
      _
    $region29: #{tpu_custom_call.1} parent=1 // pred_fallthru
      _
    %v30 = vld [vmem:[%s0] sm:$0xff]
    %v31 = vpack.c.bf16 %v30, %v30
    %v32 = vld [vmem:[%s1] sm:$0xf]
    %v33 = vld [vmem:[%s1 + $0x4] sm:$0xf]
    %v34 = vld [vmem:[%s1 + $0x8] sm:$0xf]
    %v35 = vld [vmem:[%s1 + $0xc] sm:$0xf]
    %v36 = vld [vmem:[%s1 + $0x10] sm:$0xf]
    %v37 = vld [vmem:[%s1 + $0x14] sm:$0xf]
    %v38 = vld [vmem:[%s1 + $0x18] sm:$0xf]
    %v39 = vld [vmem:[%s1 + $0x1c] sm:$0xf]
    %v40 = vld [vmem:[%s1 + $0x20] sm:$0xf]
    %v41 = vld [vmem:[%s1 + $0x24] sm:$0xf]
    %v42 = vld [vmem:[%s1 + $0x28] sm:$0xf]
    %v43 = vld [vmem:[%s1 + $0x2c] sm:$0xf]
    %v44 = vld [vmem:[%s2] sm:$0xff]
    %v45 = vld [vmem:[%s2 + $0x8] sm:$0xff]
    %v46 = vld [vmem:[%s2 + $0x10] sm:$0xff]
    %v47 = vld [vmem:[%s2 + $0x18] sm:$0xff]
    %v48 = vld [vmem:[%s2 + $0x20] sm:$0xff]
    %v49 = vld [vmem:[%s2 + $0x28] sm:$0xff]
    %v50 = vld [vmem:[%s2 + $0x30] sm:$0xff]
    %v51 = vld [vmem:[%s2 + $0x38] sm:$0xff]
    %v52 = vld [vmem:[%s2 + $0x40] sm:$0xff]
    %v53 = vld [vmem:[%s2 + $0x48] sm:$0xff]
    %v54 = vld [vmem:[%s2 + $0x50] sm:$0xff]
    %v55 = vld [vmem:[%s2 + $0x58] sm:$0xff]
    %57 = vset.pattern.permute.xlu0 0
    %58 = vperm.xlu0 %57, %v44
    %v59 = vpop.permute.xlu0 %58
    %62 = vset.pattern.permute.xlu0 0
    %63 = vperm.xlu0 %62, %v45
    %v64 = vpop.permute.xlu0 %63
    %67 = vset.pattern.permute.xlu0 0
    %68 = vperm.xlu0 %67, %v46
    %v69 = vpop.permute.xlu0 %68
    %72 = vset.pattern.permute.xlu0 0
    %73 = vperm.xlu0 %72, %v47
    %v74 = vpop.permute.xlu0 %73
    %77 = vset.pattern.permute.xlu0 0
    %78 = vperm.xlu0 %77, %v48
    %v79 = vpop.permute.xlu0 %78
    %82 = vset.pattern.permute.xlu0 0
    %83 = vperm.xlu0 %82, %v49
    %v84 = vpop.permute.xlu0 %83
    %87 = vset.pattern.permute.xlu0 0
    %88 = vperm.xlu0 %87, %v50
    %v89 = vpop.permute.xlu0 %88
    %92 = vset.pattern.permute.xlu0 0
    %93 = vperm.xlu0 %92, %v51
    %v94 = vpop.permute.xlu0 %93
    %97 = vset.pattern.permute.xlu0 0
    %98 = vperm.xlu0 %97, %v52
    %v99 = vpop.permute.xlu0 %98
    %102 = vset.pattern.permute.xlu0 0
    %103 = vperm.xlu0 %102, %v53
    %v104 = vpop.permute.xlu0 %103
    %107 = vset.pattern.permute.xlu0 0
    %108 = vperm.xlu0 %107, %v54
    %v109 = vpop.permute.xlu0 %108
    %112 = vset.pattern.permute.xlu0 0
    %113 = vperm.xlu0 %112, %v55
    %v114 = vpop.permute.xlu0 %113
    %v128 = vunpack.c.l.b16 %v32
    %v129 = vunpack.c.l.b16 %v33
    %v130 = vunpack.c.l.b16 %v34
    %v131 = vunpack.c.l.b16 %v35
    %v132 = vunpack.c.l.b16 %v36
    %v133 = vunpack.c.l.b16 %v37
    %v134 = vunpack.c.l.b16 %v38
    %v135 = vunpack.c.l.b16 %v39
    %v136 = vunpack.c.l.b16 %v40
    %v137 = vunpack.c.l.b16 %v41
    %v138 = vunpack.c.l.b16 %v42
    %v139 = vunpack.c.l.b16 %v43
    %v140 = vpack.c.b16 %v129, %v128
    %v141 = vpack.c.b16 %v131, %v130
    %v142 = vpack.c.b16 %v133, %v132
    %v143 = vpack.c.b16 %v135, %v134
    %v144 = vpack.c.b16 %v137, %v136
    %v145 = vpack.c.b16 %v139, %v138
    %vm146 = vcmask 523264
    %v148 = vsel %vm146, %v140, 0
    %v151 = vsel %vm146, %v141, 0
    %v154 = vsel %vm146, %v142, 0
    %v157 = vsel %vm146, %v143, 0
    %v160 = vsel %vm146, %v144, 0
    %v163 = vsel %vm146, %v145, 0
    %v166 = vsel %vm146, %v31, 0
    %168 = vmatprep.subr.bf16.mxu0 0
    %169 = vmatpush1.bf16.xpose.msra.mxu0 %v166
    %170 = vmatprep.subr.bf16.mxu0 0
    %171 = vmatpush1.bf16.xpose.msra.mxu0 0
    %172 = vmatprep.subr.bf16.mxu0 0
    %173 = vmatpush1.bf16.xpose.msra.mxu0 0
    %174 = vmatprep.subr.bf16.mxu0 0
    %175 = vmatpush1.bf16.xpose.msra.mxu0 0
    %176 = vmatprep.subr.bf16.mxu0 0
    %177 = vmatpush1.bf16.xpose.msra.mxu0 0
    %178 = vmatprep.subr.bf16.mxu0 0
    %179 = vmatpush1.bf16.xpose.msra.mxu0 0
    %180 = vmatprep.subr.bf16.mxu0 0
    %181 = vmatpush1.bf16.xpose.msra.mxu0 0
    %182 = vmatprep.subr.bf16.mxu0 0
    %183 = vmatpush1.bf16.xpose.msra.mxu0 0
    %184 = vmatprep.subr.bf16.mxu0 0
    %185 = vmatpush1.bf16.xpose.msra.mxu0 0
    %186 = vmatprep.subr.bf16.mxu0 0
    %187 = vmatpush1.bf16.xpose.msra.mxu0 0
    %188 = vmatprep.subr.bf16.mxu0 0
    %189 = vmatpush1.bf16.xpose.msra.mxu0 0
    %190 = vmatprep.subr.bf16.mxu0 0
    %191 = vmatpush1.bf16.xpose.msra.mxu0 0
    %192 = vmatprep.subr.bf16.mxu0 0
    %193 = vmatpush1.bf16.xpose.msra.mxu0 0
    %194 = vmatprep.subr.bf16.mxu0 0
    %195 = vmatpush1.bf16.xpose.msra.mxu0 0
    %196 = vmatprep.subr.bf16.mxu0 0
    %197 = vmatpush1.bf16.xpose.msra.mxu0 0
    %198 = vmatprep.subr.bf16.mxu0 0
    %199 = vmatpush1.bf16.xpose.msra.mxu0 0
    %200 = vmatprep.mubr.bf16.mxu0 0
    %201 = vmatmul.mubr.bf16.gmra.mrb[0].mxu0 %v148
    %v202 = vpop.f32.mrb[0].mxu0
    %v203 = vadd.f32 %v59, %v202
    %v204 = vpop.f32.mrb[0].mxu0
    %v205 = vpop.f32.mrb[0].mxu0
    %v206 = vadd.f32 %v64, %v205
    %v207 = vpop.f32.mrb[0].mxu0
    %208 = vmatprep.mubr.bf16.mxu0 0
    %209 = vmatmul.mubr.bf16.gmra.mrb[0].mxu0 %v151
    %v210 = vpop.f32.mrb[0].mxu0
    %v211 = vadd.f32 %v69, %v210
    %v212 = vpop.f32.mrb[0].mxu0
    %v213 = vpop.f32.mrb[0].mxu0
    %v214 = vadd.f32 %v74, %v213
    %v215 = vpop.f32.mrb[0].mxu0
    %216 = vmatprep.mubr.bf16.mxu0 0
    %217 = vmatmul.mubr.bf16.gmra.mrb[0].mxu0 %v154
    %v218 = vpop.f32.mrb[0].mxu0
    %v219 = vadd.f32 %v79, %v218
    %v220 = vpop.f32.mrb[0].mxu0
    %v221 = vpop.f32.mrb[0].mxu0
    %v222 = vadd.f32 %v84, %v221
    %v223 = vpop.f32.mrb[0].mxu0
    %224 = vmatprep.mubr.bf16.mxu0 0
    %225 = vmatmul.mubr.bf16.gmra.mrb[0].mxu0 %v157
    %v226 = vpop.f32.mrb[0].mxu0
    %v227 = vadd.f32 %v89, %v226
    %v228 = vpop.f32.mrb[0].mxu0
    %v229 = vpop.f32.mrb[0].mxu0
    %v230 = vadd.f32 %v94, %v229
    %v231 = vpop.f32.mrb[0].mxu0
    %232 = vmatprep.mubr.bf16.mxu0 0
    %233 = vmatmul.mubr.bf16.gmra.mrb[0].mxu0 %v160
    %v234 = vpop.f32.mrb[0].mxu0
    %v235 = vadd.f32 %v99, %v234
    %v236 = vpop.f32.mrb[0].mxu0
    %v237 = vpop.f32.mrb[0].mxu0
    %v238 = vadd.f32 %v104, %v237
    %v239 = vpop.f32.mrb[0].mxu0
    %240 = vmatprep.mubr.bf16.mxu0 0
    %241 = vmatmul.mubr.bf16.gmra.mrb[0].mxu0 %v163
    %v242 = vpop.f32.mrb[0].mxu0
    %v243 = vadd.f32 %v109, %v242
    %v244 = vpop.f32.mrb[0].mxu0
    %v245 = vpop.f32.mrb[0].mxu0
    %v246 = vadd.f32 %v114, %v245
    %v247 = vpop.f32.mrb[0].mxu0
    %248 = vdwg.mxu0
    %v249 = vtanh.pop %v203
    %v250 = vtanh.pop %v206
    %v251 = vtanh.pop %v211
    %v252 = vtanh.pop %v214
    %v253 = vtanh.pop %v219
    %v254 = vtanh.pop %v222
    %v255 = vtanh.pop %v227
    %v256 = vtanh.pop %v230
    %v257 = vtanh.pop %v235
    %v258 = vtanh.pop %v238
    %v259 = vtanh.pop %v243
    %v260 = vtanh.pop %v246
    %v261 = vpack.c.bf16 %v250, %v249
    %v262 = vpack.c.bf16 %v252, %v251
    %v263 = vpack.c.bf16 %v254, %v253
    %v264 = vpack.c.bf16 %v256, %v255
    %v265 = vpack.c.bf16 %v258, %v257
    %v266 = vpack.c.bf16 %v260, %v259
    %v267 = vld [vmem:[%s3] sm:$0xf]
    %v268 = vld [vmem:[%s3 + $0x4] sm:$0xf]
    %v269 = vld [vmem:[%s3 + $0x8] sm:$0xf]
    %v270 = vld [vmem:[%s3 + $0xc] sm:$0xf]
    %v271 = vld [vmem:[%s3 + $0x10] sm:$0x1]
    %v272 = vld [vmem:[%s4] sm:$0xff]
    %v273 = vld [vmem:[%s4 + $0x8] sm:$0xff]
    %v274 = vld [vmem:[%s4 + $0x10] sm:$0xff]
    %v275 = vld [vmem:[%s4 + $0x18] sm:$0xff]
    %v276 = vld [vmem:[%s4 + $0x20] sm:$0x3]
    %278 = vset.pattern.permute.xlu0 0
    %279 = vperm.xlu0 %278, %v272
    %v280 = vpop.permute.xlu0 %279
    %283 = vset.pattern.permute.xlu0 0
    %284 = vperm.xlu0 %283, %v273
    %v285 = vpop.permute.xlu0 %284
    %288 = vset.pattern.permute.xlu0 0
    %289 = vperm.xlu0 %288, %v274
    %v290 = vpop.permute.xlu0 %289
    %293 = vset.pattern.permute.xlu0 0
    %294 = vperm.xlu0 %293, %v275
    %v295 = vpop.permute.xlu0 %294
    %298 = vset.pattern.permute.xlu0 0
    %299 = vperm.xlu0 %298, %v276
    %v300 = vpop.permute.xlu0 %299
    %v307 = vunpack.c.l.b16 %v267
    %v308 = vunpack.c.l.b16 %v268
    %v309 = vunpack.c.l.b16 %v269
    %v310 = vunpack.c.l.b16 %v270
    %v311 = vunpack.c.l.b16 %v271
    %v312 = vpack.c.b16 %v308, %v307
    %v313 = vpack.c.b16 %v310, %v309
    %v314 = vpack.c.b16 %v311, %v311
    %vm315 = vcmask 785408
    %v317 = vsel %vm315, %v312, 0
    %v320 = vsel %vm315, %v313, 0
    %v323 = vsel %vm315, %v314, 0
    %325 = vmatprep.subr.bf16.mxu0 0
    %326 = vmatpush1.bf16.msra.mxu0 %v261
    %327 = vmatprep.subr.bf16.mxu0 0
    %328 = vmatpush1.bf16.msra.mxu0 %v262
    %329 = vmatprep.subr.bf16.mxu0 0
    %330 = vmatpush1.bf16.msra.mxu0 %v263
    %331 = vmatprep.subr.bf16.mxu0 0
    %332 = vmatpush1.bf16.msra.mxu0 %v264
    %333 = vmatprep.subr.bf16.mxu0 0
    %334 = vmatpush1.bf16.msra.mxu0 %v265
    %335 = vmatprep.subr.bf16.mxu0 0
    %336 = vmatpush1.bf16.msra.mxu0 %v266
    %337 = vmatprep.subr.bf16.mxu0 0
    %338 = vmatpush1.bf16.msra.mxu0 0
    %339 = vmatprep.subr.bf16.mxu0 0
    %340 = vmatpush1.bf16.msra.mxu0 0
    %341 = vmatprep.subr.bf16.mxu0 0
    %342 = vmatpush1.bf16.msra.mxu0 0
    %343 = vmatprep.subr.bf16.mxu0 0
    %344 = vmatpush1.bf16.msra.mxu0 0
    %345 = vmatprep.subr.bf16.mxu0 0
    %346 = vmatpush1.bf16.msra.mxu0 0
    %347 = vmatprep.subr.bf16.mxu0 0
    %348 = vmatpush1.bf16.msra.mxu0 0
    %349 = vmatprep.subr.bf16.mxu0 0
    %350 = vmatpush1.bf16.msra.mxu0 0
    %351 = vmatprep.subr.bf16.mxu0 0
    %352 = vmatpush1.bf16.msra.mxu0 0
    %353 = vmatprep.subr.bf16.mxu0 0
    %354 = vmatpush1.bf16.msra.mxu0 0
    %355 = vmatprep.subr.bf16.mxu0 0
    %356 = vmatpush1.bf16.msra.mxu0 0
    %357 = vmatprep.mubr.bf16.mxu0 0
    %358 = vmatmul.mubr.bf16.gmra.mrb[0].mxu0 %v317
    %v359 = vpop.f32.mrb[0].mxu0
    %v360 = vadd.f32 %v280, %v359
    %v361 = vpop.f32.mrb[0].mxu0
    %v362 = vpop.f32.mrb[0].mxu0
    %v363 = vadd.f32 %v285, %v362
    %v364 = vpop.f32.mrb[0].mxu0
    %365 = vmatprep.mubr.bf16.mxu0 0
    %366 = vmatmul.mubr.bf16.gmra.mrb[0].mxu0 %v320
    %v367 = vpop.f32.mrb[0].mxu0
    %v368 = vadd.f32 %v290, %v367
    %v369 = vpop.f32.mrb[0].mxu0
    %v370 = vpop.f32.mrb[0].mxu0
    %v371 = vadd.f32 %v295, %v370
    %v372 = vpop.f32.mrb[0].mxu0
    %373 = vmatprep.mubr.bf16.mxu0 0
    %374 = vmatmul.mubr.bf16.gmra.mrb[0].mxu0 %v323
    %v375 = vpop.f32.mrb[0].mxu0
    %v376 = vadd.f32 %v300, %v375
    %v377 = vpop.f32.mrb[0].mxu0
    %v378 = vpop.f32.mrb[0].mxu0
    %v379 = vpop.f32.mrb[0].mxu0
    %380 = vdwg.mxu0
    %v381 = vtanh.pop %v360
    %v382 = vtanh.pop %v363
    %v383 = vtanh.pop %v368
    %v384 = vtanh.pop %v371
    %v385 = vtanh.pop %v376
    %v386 = vpack.c.bf16 %v382, %v381
    %v387 = vpack.c.bf16 %v384, %v383
    %v388 = vpack.c.bf16 %v385, %v385
    %v389 = vld [vmem:[%s5] sm:$0x1]
    %v390 = vld [vmem:[#allocation2] sm:$0x1]
    %392 = vset.pattern.permute.xlu0 0
    %393 = vperm.xlu0 %392, %v390
    %v394 = vpop.permute.xlu0 %393
    %v396 = vlaneseq
    %v397 = vshrl.u32 %v396, 7
    %v398 = vsub.s32 0, %v397
    %v399 = vrot.slane %v394, %v398
    %vm400 = vcmask 277504
    %v402 = vsel %vm400, %v389, 0
    %vm404 = vcmask 1040384
    %v406 = vsel %vm404, %v388, 0
    %408 = vmatprep.subr.bf16.mxu0 0
    %409 = vmatpush1.bf16.msra.mxu0 %v386
    %410 = vmatprep.subr.bf16.mxu0 0
    %411 = vmatpush1.bf16.msra.mxu0 %v387
    %412 = vmatprep.subr.bf16.mxu0 0
    %413 = vmatpush1.bf16.msra.mxu0 %v406
    %414 = vmatprep.subr.bf16.mxu0 0
    %415 = vmatpush1.bf16.msra.mxu0 0
    %416 = vmatprep.subr.bf16.mxu0 0
    %417 = vmatpush1.bf16.msra.mxu0 0
    %418 = vmatprep.subr.bf16.mxu0 0
    %419 = vmatpush1.bf16.msra.mxu0 0
    %420 = vmatprep.subr.bf16.mxu0 0
    %421 = vmatpush1.bf16.msra.mxu0 0
    %422 = vmatprep.subr.bf16.mxu0 0
    %423 = vmatpush1.bf16.msra.mxu0 0
    %424 = vmatprep.subr.bf16.mxu0 0
    %425 = vmatpush1.bf16.msra.mxu0 0
    %426 = vmatprep.subr.bf16.mxu0 0
    %427 = vmatpush1.bf16.msra.mxu0 0
    %428 = vmatprep.subr.bf16.mxu0 0
    %429 = vmatpush1.bf16.msra.mxu0 0
    %430 = vmatprep.subr.bf16.mxu0 0
    %431 = vmatpush1.bf16.msra.mxu0 0
    %432 = vmatprep.subr.bf16.mxu0 0
    %433 = vmatpush1.bf16.msra.mxu0 0
    %434 = vmatprep.subr.bf16.mxu0 0
    %435 = vmatpush1.bf16.msra.mxu0 0
    %436 = vmatprep.subr.bf16.mxu0 0
    %437 = vmatpush1.bf16.msra.mxu0 0
    %438 = vmatprep.subr.bf16.mxu0 0
    %439 = vmatpush1.bf16.msra.mxu0 0
    %440 = vmatprep.mubr.bf16.mxu0 0
    %441 = vmatmul.mubr.bf16.gmra.mrb[0].mxu0 %v402
    %v442 = vpop.f32.mrb[0].mxu0
    %v443 = vadd.f32 %v399, %v442
    %v444 = vpop.f32.mrb[0].mxu0
    %v445 = vpop.f32.mrb[0].mxu0
    %v446 = vpop.f32.mrb[0].mxu0
    %447 = vdwg.mxu0
    %vm448 = vcmask 57344
    %449 = vst.msk [vmem:[#allocation3] sm:$0x1] %vm448, %v443
    // Predicated region
    $region30: #{tpu_custom_call.1} parent=1 // pred_check
      _
    $region31: #{tpu_custom_call.1} parent=1 // pred_check_branch
      %451 = sbr.rel (0) target = $region33
    $region32: #{tpu_custom_call.1} parent=1 // pred_region
      %s453 = ssub.s32 16, 16
      %454 = vsyncadd [#allocation4], %s453
      %s456 = sshll.u32 [#allocation3], 4
      %s457 = int_to_ptr.vmem [resolvable:$true] %s456
      %459 = dma.vmem_to_hbm [thread:$0]  %s457, 16, %s7, [#allocation4]
    $region33: #{tpu_custom_call.1} parent=1 // pred_fallthru
      _
    // Predicated region
    $region34: #{tpu_custom_call.1} parent=1 // pred_check
      _
    $region35: #{tpu_custom_call.1} parent=1 // pred_check_branch
      %461 = sbr.rel (0) target = $region37
    $region36: #{tpu_custom_call.1} parent=1 // pred_region
      %462 = dma.done [#allocation4], 16
    $region37: #{tpu_custom_call.1} parent=1 // pred_fallthru
      _
    %463 = vsyncpa [#allocation4], 1

</llo_original>
